<compile_context>
chip_gen: v5e
topology: v5e:2x2
jax: 0.10.0
libtpu: 0.0.40
codegen_flags: <defaults>
</compile_context>

<pallas_src>
import jax
import jax.numpy as jnp
from jax.experimental import pallas as pl
from jax.experimental.pallas import tpu as pltpu


def _round_up(n, m):
    return ((n + m - 1) // m) * m


# --------------------------------------------------------------------------
# Kernel
# --------------------------------------------------------------------------
def sii_mlp_kernel(x_ref, w1_ref, b1_ref, w2_ref, b2_ref,
                   w3_ref, b3_ref, w4_ref, b4_ref, o_ref):
    # In-kernel bf16 cast of the streamed x tile (hidden under the DMA).
    x = x_ref[...].astype(jnp.bfloat16)                        # (TB, D)

    # Layer 1: Linear(D, 128) + ReLU      (Dropout -> identity at inference)
    h1 = jnp.dot(x, w1_ref[...], preferred_element_type=jnp.float32)
    h1 = jnp.maximum(h1 + b1_ref[...], 0.0)                    # (TB, 128) f32

    # Layer 2: Linear(128, 64) + ReLU     (Dropout -> identity at inference)
    h2 = jnp.dot(h1.astype(jnp.bfloat16), w2_ref[...],
                 preferred_element_type=jnp.float32)
    h2 = jnp.maximum(h2 + b2_ref[...], 0.0)                    # (TB, 64)

    # Layer 3: Linear(64, 32) + ReLU
    h3 = jnp.dot(h2.astype(jnp.bfloat16), w3_ref[...],
                 preferred_element_type=jnp.float32)
    h3 = jnp.maximum(h3 + b3_ref[...], 0.0)                    # (TB, 32)

    # Layer 4: Linear(32, 1) as VPU multiply + lane reduce; lane-dense store.
    row = jnp.sum(h3 * w4_ref[...], axis=-1)[None, :]          # (1, TB)
    o_ref[...] = (row + b4_ref[...]).astype(o_ref.dtype)


# --------------------------------------------------------------------------
# Wrapper / tiling logic
# --------------------------------------------------------------------------
def _vmem_capacity_bytes():
    """Generation-aware physical VMEM per TensorCore (fallback: v7x's 64 MiB)."""
    try:
        cap = getattr(pltpu.get_tpu_info(), "vmem_capacity_bytes", None)
        if cap:
            return int(cap)
    except Exception:
        pass
    return 64 << 20


def _vmem_needed_bytes(tb, d, weight_bytes):
    """Rough VMEM working-set estimate for one batch tile (lane-padded)."""
    d_pad = _round_up(max(d, 128), 128)
    x_bytes = 2 * tb * d_pad * 4 + tb * d_pad * 2     # double-buffered f32 tile + bf16 cast
    act_bytes = tb * 128 * 20                          # h1/h2/h3 (+ bf16 copies, temps)
    out_bytes = 2 * tb * 4                             # double-buffered output row block
    return x_bytes + act_bytes + out_bytes + 4 * weight_bytes + (4 << 20)


def _choose_batch_tile(batch, d, weight_bytes, vmem_cap):
    """Largest batch tile (<=4096 rows) fitting a generation-aware VMEM budget,
    while keeping >=2 grid steps for mid-sized batches (v7x megacore)."""
    budget = max(24 << 20, min(vmem_cap // 2, 96 << 20))
    if batch <= 256:
        return batch                                   # single full-batch tile
    tb = 256
    for cand in (4096, 2048, 1024, 512, 256):
        if _vmem_needed_bytes(cand, d, weight_bytes) <= budget:
            tb = cand
            break
    if batch <= tb:
        # Split into >=2 tiles so ("parallel",) can shard across 2 TensorCores.
        tb = max(128, _round_up(pl.cdiv(batch, 2), 128))
    return tb


def sii_mlp_forward(x, prep):
    """x: (B, D) float32.  prep: kernel-ready params from prepare_params()."""
    batch, d = x.shape
    w1, b1 = prep["w1"], prep["b1"]
    w2, b2 = prep["w2"], prep["b2"]
    w3, b3 = prep["w3"], prep["b3"]
    w4, b4 = prep["w4_row"], prep["b4"]

    weight_bytes = sum(int(a.size) * a.dtype.itemsize
                       for a in (w1, b1, w2, b2, w3, b3, w4, b4))

    vmem_cap = _vmem_capacity_bytes()
    tb = _choose_batch_tile(batch, d, weight_bytes, vmem_cap)
    num_tiles = pl.cdiv(batch, tb)

    vmem_needed = _vmem_needed_bytes(tb, d, weight_bytes)
    # Never clamp below the estimated requirement; cap by physical VMEM.
    vmem_limit = int(min(max(vmem_needed, 32 << 20),
                         max(vmem_cap - (4 << 20), vmem_needed)))

    # Weights/biases: full-array blocks, constant index_map -> VMEM-resident.
    def resident(a):
        return pl.BlockSpec(a.shape, lambda i: (0,) * a.ndim)

    flops = 2 * batch * (d * 128 + 128 * 64 + 64 * 32 + 32)
    bytes_accessed = batch * d * 4 + batch * 4 + weight_bytes

    out = pl.pallas_call(
        sii_mlp_kernel,
        out_shape=jax.ShapeDtypeStruct((1, num_tiles * tb), jnp.float32),
        grid=(num_tiles,),
        in_specs=[
            pl.BlockSpec((tb, d), lambda i: (i, 0)),
            resident(w1), resident(b1), resident(w2), resident(b2),
            resident(w3), resident(b3), resident(w4), resident(b4),
        ],
        out_specs=pl.BlockSpec((1, tb), lambda i: (0, i)),
        compiler_params=pltpu.CompilerParams(
            dimension_semantics=("parallel",),
            vmem_limit_bytes=vmem_limit),
        cost_estimate=pl.CostEstimate(
            flops=flops, transcendentals=0, bytes_accessed=bytes_accessed),
    )(x, w1, b1, w2, b2, w3, b3, w4, b4)

    return out.reshape(num_tiles * tb, 1)[:batch]


# --------------------------------------------------------------------------
# Params
# --------------------------------------------------------------------------
def init_params(key, input_dim):
    """Deterministic synthetic init matching the nn.Linear shapes."""
    dims = [(input_dim, 128), (128, 64), (64, 32), (32, 1)]
    params = {}
    for i, (din, dout) in enumerate(dims, start=1):
        key, kw, kb = jax.random.split(key, 3)
        bound = 1.0 / jnp.sqrt(din)
        params[f"w{i}"] = jax.random.uniform(
            kw, (din, dout), jnp.float32, minval=-bound, maxval=bound)
        params[f"b{i}"] = jax.random.uniform(
            kb, (1, dout), jnp.float32, minval=-bound, maxval=bound)
    return params


def prepare_params(params):
    """One-time conversion to kernel-ready dtypes/layouts (no per-call casts)."""
    return {
        "w1": params["w1"].astype(jnp.bfloat16),
        "w2": params["w2"].astype(jnp.bfloat16),
        "w3": params["w3"].astype(jnp.bfloat16),
        "w4_row": params["w4"].T.astype(jnp.float32),          # (1, 32) f32
        "b1": params["b1"].reshape(1, -1).astype(jnp.float32),
        "b2": params["b2"].reshape(1, -1).astype(jnp.float32),
        "b3": params["b3"].reshape(1, -1).astype(jnp.float32),
        "b4": params["b4"].reshape(1, -1).astype(jnp.float32),  # (1, 1)
    }


def reference_forward(x, prep):
    """Plain-JAX reference with matching bf16-input / f32-accumulate numerics."""
    h = jnp.dot(x.astype(jnp.bfloat16), prep["w1"],
                preferred_element_type=jnp.float32) + prep["b1"]
    h = jnp.maximum(h, 0.0)
    h = jnp.dot(h.astype(jnp.bfloat16), prep["w2"],
                preferred_element_type=jnp.float32) + prep["b2"]
    h = jnp.maximum(h, 0.0)
    h = jnp.dot(h.astype(jnp.bfloat16), prep["w3"],
                preferred_element_type=jnp.float32) + prep["b3"]
    h = jnp.maximum(h, 0.0)
    return jnp.sum(h * prep["w4_row"], axis=-1, keepdims=True) + prep["b4"]


if __name__ == "__main__":
    key = jax.random.PRNGKey(0)
    key, kx, kp = jax.random.split(key, 3)

    batch, input_dim = 8, 32
    x = jax.random.normal(kx, (batch, input_dim), jnp.float32)
    params = init_params(kp, input_dim)
    prep = prepare_params(params)

    out = jax.block_until_ready(sii_mlp_forward(x, prep))
    ref = reference_forward(x, prep)

    assert out.shape == (batch, 1)
    max_err = float(jnp.max(jnp.abs(out - ref)))
    assert jnp.allclose(out, ref, atol=2e-3, rtol=2e-3), ("max abs err", max_err)

    print("KERNEL_OK")
</pallas_src>

<mosaic_0001>
module attributes {stable_mosaic.version = 11 : i64} {
  func.func @sii_mlp_kernel(%arg0: i32, %arg1: memref<8x32xf32, #tpu.memory_space<vmem>>, %arg2: memref<32x128xbf16, #tpu.memory_space<vmem>>, %arg3: memref<1x128xf32, #tpu.memory_space<vmem>>, %arg4: memref<128x64xbf16, #tpu.memory_space<vmem>>, %arg5: memref<1x64xf32, #tpu.memory_space<vmem>>, %arg6: memref<64x32xbf16, #tpu.memory_space<vmem>>, %arg7: memref<1x32xf32, #tpu.memory_space<vmem>>, %arg8: memref<1x32xf32, #tpu.memory_space<vmem>>, %arg9: memref<1x1xf32, #tpu.memory_space<vmem>>, %arg10: memref<1x8xf32, #tpu.memory_space<vmem>>) attributes {dimension_semantics = [#tpu.dimension_semantics<parallel>], iteration_bounds = array<i64: 1>, scalar_prefetch = 0 : i64, scratch_operands = 0 : i64, tpu.core_type = #tpu.core_type<tc>, window_params = [{transform_indices = @transform_0, window_bounds = array<i64: 8, 32>}, {pipeline_mode = #tpu.pipeline_mode<synchronous>, transform_indices = @transform_1, window_bounds = array<i64: 32, 128>}, {pipeline_mode = #tpu.pipeline_mode<synchronous>, transform_indices = @transform_2, window_bounds = array<i64: 1, 128>}, {pipeline_mode = #tpu.pipeline_mode<synchronous>, transform_indices = @transform_3, window_bounds = array<i64: 128, 64>}, {pipeline_mode = #tpu.pipeline_mode<synchronous>, transform_indices = @transform_4, window_bounds = array<i64: 1, 64>}, {pipeline_mode = #tpu.pipeline_mode<synchronous>, transform_indices = @transform_5, window_bounds = array<i64: 64, 32>}, {pipeline_mode = #tpu.pipeline_mode<synchronous>, transform_indices = @transform_6, window_bounds = array<i64: 1, 32>}, {pipeline_mode = #tpu.pipeline_mode<synchronous>, transform_indices = @transform_7, window_bounds = array<i64: 1, 32>}, {pipeline_mode = #tpu.pipeline_mode<synchronous>, transform_indices = @transform_8, window_bounds = array<i64: 1, 1>}, {transform_indices = @transform_9, window_bounds = array<i64: 1, 8>}]} {
    %c0 = arith.constant 0 : index
    %c0_0 = arith.constant 0 : index
    %0 = vector.load %arg1[%c0, %c0_0] : memref<8x32xf32, #tpu.memory_space<vmem>>, vector<8x32xf32>
    %1 = arith.truncf %0 : vector<8x32xf32> to vector<8x32xbf16>
    %c0_1 = arith.constant 0 : index
    %c0_2 = arith.constant 0 : index
    %2 = vector.load %arg2[%c0_1, %c0_2] : memref<32x128xbf16, #tpu.memory_space<vmem>>, vector<32x128xbf16>
    %cst = arith.constant dense<0.000000e+00> : vector<8x128xf32>
    %3 = tpu.matmul %1, %2, %cst {dimension_numbers = #tpu.dot_dimension_numbers<[1], [0], [0], [1], [0, 0, 1, 1], [], []>} : vector<8x32xbf16>, vector<32x128xbf16>, vector<8x128xf32> -> vector<8x128xf32>
    %c0_3 = arith.constant 0 : index
    %c0_4 = arith.constant 0 : index
    %4 = vector.load %arg3[%c0_3, %c0_4] : memref<1x128xf32, #tpu.memory_space<vmem>>, vector<1x128xf32>
    %5 = vector.broadcast %4 : vector<1x128xf32> to vector<8x128xf32>
    %6 = arith.addf %3, %5 : vector<8x128xf32>
    %cst_5 = arith.constant 0.000000e+00 : f32
    %7 = vector.broadcast %cst_5 : f32 to vector<8x128xf32>
    %8 = arith.maximumf %6, %7 : vector<8x128xf32>
    %9 = arith.truncf %8 : vector<8x128xf32> to vector<8x128xbf16>
    %c0_6 = arith.constant 0 : index
    %c0_7 = arith.constant 0 : index
    %10 = vector.load %arg4[%c0_6, %c0_7] : memref<128x64xbf16, #tpu.memory_space<vmem>>, vector<128x64xbf16>
    %cst_8 = arith.constant dense<0.000000e+00> : vector<8x64xf32>
    %11 = tpu.matmul %9, %10, %cst_8 {dimension_numbers = #tpu.dot_dimension_numbers<[1], [0], [0], [1], [0, 0, 1, 1], [], []>} : vector<8x128xbf16>, vector<128x64xbf16>, vector<8x64xf32> -> vector<8x64xf32>
    %c0_9 = arith.constant 0 : index
    %c0_10 = arith.constant 0 : index
    %12 = vector.load %arg5[%c0_9, %c0_10] : memref<1x64xf32, #tpu.memory_space<vmem>>, vector<1x64xf32>
    %13 = vector.broadcast %12 : vector<1x64xf32> to vector<8x64xf32>
    %14 = arith.addf %11, %13 : vector<8x64xf32>
    %cst_11 = arith.constant 0.000000e+00 : f32
    %15 = vector.broadcast %cst_11 : f32 to vector<8x64xf32>
    %16 = arith.maximumf %14, %15 : vector<8x64xf32>
    %17 = arith.truncf %16 : vector<8x64xf32> to vector<8x64xbf16>
    %c0_12 = arith.constant 0 : index
    %c0_13 = arith.constant 0 : index
    %18 = vector.load %arg6[%c0_12, %c0_13] : memref<64x32xbf16, #tpu.memory_space<vmem>>, vector<64x32xbf16>
    %cst_14 = arith.constant dense<0.000000e+00> : vector<8x32xf32>
    %19 = tpu.matmul %17, %18, %cst_14 {dimension_numbers = #tpu.dot_dimension_numbers<[1], [0], [0], [1], [0, 0, 1, 1], [], []>} : vector<8x64xbf16>, vector<64x32xbf16>, vector<8x32xf32> -> vector<8x32xf32>
    %c0_15 = arith.constant 0 : index
    %c0_16 = arith.constant 0 : index
    %20 = vector.load %arg7[%c0_15, %c0_16] : memref<1x32xf32, #tpu.memory_space<vmem>>, vector<1x32xf32>
    %21 = vector.broadcast %20 : vector<1x32xf32> to vector<8x32xf32>
    %22 = arith.addf %19, %21 : vector<8x32xf32>
    %cst_17 = arith.constant 0.000000e+00 : f32
    %23 = vector.broadcast %cst_17 : f32 to vector<8x32xf32>
    %24 = arith.maximumf %22, %23 : vector<8x32xf32>
    %c0_18 = arith.constant 0 : index
    %c0_19 = arith.constant 0 : index
    %25 = vector.load %arg8[%c0_18, %c0_19] : memref<1x32xf32, #tpu.memory_space<vmem>>, vector<1x32xf32>
    %26 = vector.broadcast %25 : vector<1x32xf32> to vector<8x32xf32>
    %27 = arith.mulf %24, %26 : vector<8x32xf32>
    %cst_20 = arith.constant dense<0.000000e+00> : vector<8xf32>
    %28 = vector.multi_reduction <add>, %27, %cst_20 [1] : vector<8x32xf32> to vector<8xf32>
    %29 = vector.shape_cast %28 : vector<8xf32> to vector<1x8xf32>
    %c0_21 = arith.constant 0 : index
    %c0_22 = arith.constant 0 : index
    %30 = vector.load %arg9[%c0_21, %c0_22] : memref<1x1xf32, #tpu.memory_space<vmem>>, vector<1x1xf32>
    %31 = vector.broadcast %30 : vector<1x1xf32> to vector<1x8xf32>
    %32 = arith.addf %29, %31 : vector<1x8xf32>
    %c0_23 = arith.constant 0 : index
    %c0_24 = arith.constant 0 : index
    %33 = vector.load %arg10[%c0_23, %c0_24] : memref<1x8xf32, #tpu.memory_space<vmem>>, vector<1x8xf32>
    tpu.vector_store %arg10[%c0_23, %c0_24], %32 {strides = array<i32>} : memref<1x8xf32, #tpu.memory_space<vmem>>, vector<1x8xf32>,
    return
  }
  func.func @transform_0(%arg0: i32) -> (i32, i32) {
    %c0_i32 = arith.constant 0 : i32
    %c0_i32_0 = arith.constant 0 : i32
    return %arg0, %c0_i32 : i32, i32
  }
  func.func @transform_1(%arg0: i32) -> (i32, i32) {
    %c0_i32 = arith.constant 0 : i32
    %c0_i32_0 = arith.constant 0 : i32
    %c0_i32_1 = arith.constant 0 : i32
    return %c0_i32, %c0_i32_0 : i32, i32
  }
  func.func @transform_2(%arg0: i32) -> (i32, i32) {
    %c0_i32 = arith.constant 0 : i32
    %c0_i32_0 = arith.constant 0 : i32
    %c0_i32_1 = arith.constant 0 : i32
    return %c0_i32, %c0_i32_0 : i32, i32
  }
  func.func @transform_3(%arg0: i32) -> (i32, i32) {
    %c0_i32 = arith.constant 0 : i32
    %c0_i32_0 = arith.constant 0 : i32
    %c0_i32_1 = arith.constant 0 : i32
    return %c0_i32, %c0_i32_0 : i32, i32
  }
  func.func @transform_4(%arg0: i32) -> (i32, i32) {
    %c0_i32 = arith.constant 0 : i32
    %c0_i32_0 = arith.constant 0 : i32
    %c0_i32_1 = arith.constant 0 : i32
    return %c0_i32, %c0_i32_0 : i32, i32
  }
  func.func @transform_5(%arg0: i32) -> (i32, i32) {
    %c0_i32 = arith.constant 0 : i32
    %c0_i32_0 = arith.constant 0 : i32
    %c0_i32_1 = arith.constant 0 : i32
    return %c0_i32, %c0_i32_0 : i32, i32
  }
  func.func @transform_6(%arg0: i32) -> (i32, i32) {
    %c0_i32 = arith.constant 0 : i32
    %c0_i32_0 = arith.constant 0 : i32
    %c0_i32_1 = arith.constant 0 : i32
    return %c0_i32, %c0_i32_0 : i32, i32
  }
  func.func @transform_7(%arg0: i32) -> (i32, i32) {
    %c0_i32 = arith.constant 0 : i32
    %c0_i32_0 = arith.constant 0 : i32
    %c0_i32_1 = arith.constant 0 : i32
    return %c0_i32, %c0_i32_0 : i32, i32
  }
  func.func @transform_8(%arg0: i32) -> (i32, i32) {
    %c0_i32 = arith.constant 0 : i32
    %c0_i32_0 = arith.constant 0 : i32
    %c0_i32_1 = arith.constant 0 : i32
    return %c0_i32, %c0_i32_0 : i32, i32
  }
  func.func @transform_9(%arg0: i32) -> (i32, i32) {
    %c0_i32 = arith.constant 0 : i32
    %c0_i32_0 = arith.constant 0 : i32
    return %c0_i32, %arg0 : i32, i32
  }
}

</mosaic_0001>

<llo_original>
// kernel: tpu_custom_call.1
$region0: #{tpu_custom_call.1}
  #allocation0 [shape = 'u32[]', space=smem, size = 0x4, offset = 0x4, fixed_abs, tag = 'smem constant byte address 0x4 - core index']
  #allocation1 [shape = 'u32[72,128]{1,0:T(1,128)}', space=vmem, size = 0x9000, scoped, tag = 'internal scratch']
  #allocation2 [shape = 'f32[1,1]{1,0:T(1,128)S(1)}', space=vmem, size = 0x200, scoped, tag = 'scoped memory for tpu_custom_call.1']
  %s0 = inlined_call_operand.vmem [shape: f32[8,32], index: 0, kind: input, shape index: {}]
  %s1 = inlined_call_operand.vmem [shape: bf16[32,128], index: 1, kind: input, shape index: {}]
  %s2 = inlined_call_operand.vmem [shape: f32[1,128], index: 2, kind: input, shape index: {}]
  %s3 = inlined_call_operand.vmem [shape: bf16[128,64], index: 3, kind: input, shape index: {}]
  %s4 = inlined_call_operand.vmem [shape: f32[1,64], index: 4, kind: input, shape index: {}]
  %s5 = inlined_call_operand.vmem [shape: bf16[64,32], index: 5, kind: input, shape index: {}]
  %s6 = inlined_call_operand.vmem [shape: f32[1,32], index: 6, kind: input, shape index: {}]
  %s7 = inlined_call_operand.vmem [shape: f32[1,32], index: 7, kind: input, shape index: {}]
  %s8 = inlined_call_operand.<no memory space> [shape: f32[1,1], index: 8, kind: input, shape index: {}]
  %s9 = inlined_call_operand.hbm [shape: f32[1,8], index: 9, kind: output, shape index: {}]
  %s10 = sld [smem:[#allocation0]]
  $region46: #{tpu_custom_call.1} parent=0
    _
  %s12 = ssub.s32 1, %s10
  %s13 = scalar_select 0, %s12, %s10
  %v14 = vstv %s8
  %15 = vst [vmem:[#allocation2] sm:$0x1] %v14
  $region1: #{tpu_custom_call.1} parent=0
    #allocation3 [shape = 'u8[512]{0}', space=vmem, size = 0x400, scoped, tag = 'output window, operand 0, single buffered']
    #allocation4 [shape = 's32[1]{0}', space=sflag, size = 0x4, scoped, tag = 'scoped memory for tpu_custom_call.1']
    %16 = vsyncpa [#allocation4], 0
    // Predicated region
    $region2: #{tpu_custom_call.1} parent=1 // pred_check
      _
    $region3: #{tpu_custom_call.1} parent=1 // pred_check_branch
      %18 = sbr.rel (0) target = $region5
    $region4: #{tpu_custom_call.1} parent=1 // pred_region
      _
    $region5: #{tpu_custom_call.1} parent=1 // pred_fallthru
      _
    // Predicated region
    $region6: #{tpu_custom_call.1} parent=1 // pred_check
      _
    $region7: #{tpu_custom_call.1} parent=1 // pred_check_branch
      %20 = sbr.rel (0) target = $region9
    $region8: #{tpu_custom_call.1} parent=1 // pred_region
      _
    $region9: #{tpu_custom_call.1} parent=1 // pred_fallthru
      _
    // Predicated region
    $region10: #{tpu_custom_call.1} parent=1 // pred_check
      _
    $region11: #{tpu_custom_call.1} parent=1 // pred_check_branch
      %22 = sbr.rel (0) target = $region13
    $region12: #{tpu_custom_call.1} parent=1 // pred_region
      _
    $region13: #{tpu_custom_call.1} parent=1 // pred_fallthru
      _
    // Predicated region
    $region14: #{tpu_custom_call.1} parent=1 // pred_check
      _
    $region15: #{tpu_custom_call.1} parent=1 // pred_check_branch
      %24 = sbr.rel (0) target = $region17
    $region16: #{tpu_custom_call.1} parent=1 // pred_region
      _
    $region17: #{tpu_custom_call.1} parent=1 // pred_fallthru
      _
    // Predicated region
    $region18: #{tpu_custom_call.1} parent=1 // pred_check
      _
    $region19: #{tpu_custom_call.1} parent=1 // pred_check_branch
      %26 = sbr.rel (0) target = $region21
    $region20: #{tpu_custom_call.1} parent=1 // pred_region
      _
    $region21: #{tpu_custom_call.1} parent=1 // pred_fallthru
      _
    // Predicated region
    $region22: #{tpu_custom_call.1} parent=1 // pred_check
      _
    $region23: #{tpu_custom_call.1} parent=1 // pred_check_branch
      %28 = sbr.rel (0) target = $region25
    $region24: #{tpu_custom_call.1} parent=1 // pred_region
      _
    $region25: #{tpu_custom_call.1} parent=1 // pred_fallthru
      _
    // Predicated region
    $region26: #{tpu_custom_call.1} parent=1 // pred_check
      _
    $region27: #{tpu_custom_call.1} parent=1 // pred_check_branch
      %30 = sbr.rel (0) target = $region29
    $region28: #{tpu_custom_call.1} parent=1 // pred_region
      _
    $region29: #{tpu_custom_call.1} parent=1 // pred_fallthru
      _
    // Predicated region
    $region30: #{tpu_custom_call.1} parent=1 // pred_check
      _
    $region31: #{tpu_custom_call.1} parent=1 // pred_check_branch
      %32 = sbr.rel (0) target = $region33
    $region32: #{tpu_custom_call.1} parent=1 // pred_region
      _
    $region33: #{tpu_custom_call.1} parent=1 // pred_fallthru
      _
    // Predicated region
    $region34: #{tpu_custom_call.1} parent=1 // pred_check
      _
    $region35: #{tpu_custom_call.1} parent=1 // pred_check_branch
      %34 = sbr.rel (0) target = $region37
    $region36: #{tpu_custom_call.1} parent=1 // pred_region
      _
    $region37: #{tpu_custom_call.1} parent=1 // pred_fallthru
      _
    %v36 = vld [vmem:[%s0] sm:$0xff]
    %v37 = vpack.c.bf16 %v36, %v36
    %v38 = vld [vmem:[%s1] sm:$0xf]
    %v39 = vld [vmem:[%s1 + $0x4] sm:$0xf]
    %v40 = vld [vmem:[%s1 + $0x8] sm:$0xf]
    %v41 = vld [vmem:[%s1 + $0xc] sm:$0xf]
    %v42 = vld [vmem:[%s2] sm:$0x1]
    %v44 = vperm.slane %v42, 0
    %v50 = vunpack.c.l.b16 %v38
    %v51 = vunpack.c.l.b16 %v39
    %v52 = vunpack.c.l.b16 %v40
    %v53 = vunpack.c.l.b16 %v41
    %v54 = vpack.c.b16 %v51, %v50
    %v55 = vpack.c.b16 %v53, %v52
    %vm58 = vcmask 261120
    %v60 = vsel %vm58, %v37, 0
    %62 = vmatpush.bf16.msra.mxu0 0
    %63 = vmatpush.bf16.msra.mxu0 0
    %64 = vmatpush.bf16.msra.mxu0 0
    %65 = vmatpush.bf16.msra.mxu0 0
    %66 = vmatpush.bf16.msra.mxu0 0
    %67 = vmatpush.bf16.msra.mxu0 0
    %68 = vmatpush.bf16.msra.mxu0 %v55
    %69 = vmatpush.bf16.msra.mxu0 %v54
    %70 = vmatmul.bf16.gmra.mxu0 %v60
    %v71 = vpop.f32.mrf.mxu0
    %v72 = vadd.f32 %v44, %v71
    %v73 = vpop.f32.mrf.mxu0
    %74 = vdwg.mxu0
    %v75 = vmax.f32 %v72, 0.0
    %v76 = vpack.c.bf16 %v75, %v75
    %v77 = vld [vmem:[%s3] sm:$0xf]
    %v78 = vld [vmem:[%s3 + $0x4] sm:$0xf]
    %v79 = vld [vmem:[%s3 + $0x8] sm:$0xf]
    %v80 = vld [vmem:[%s3 + $0xc] sm:$0xf]
    %v81 = vld [vmem:[%s3 + $0x10] sm:$0xf]
    %v82 = vld [vmem:[%s3 + $0x14] sm:$0xf]
    %v83 = vld [vmem:[%s3 + $0x18] sm:$0xf]
    %v84 = vld [vmem:[%s3 + $0x1c] sm:$0xf]
    %v85 = vld [vmem:[%s3 + $0x20] sm:$0xf]
    %v86 = vld [vmem:[%s3 + $0x24] sm:$0xf]
    %v87 = vld [vmem:[%s3 + $0x28] sm:$0xf]
    %v88 = vld [vmem:[%s3 + $0x2c] sm:$0xf]
    %v89 = vld [vmem:[%s3 + $0x30] sm:$0xf]
    %v90 = vld [vmem:[%s3 + $0x34] sm:$0xf]
    %v91 = vld [vmem:[%s3 + $0x38] sm:$0xf]
    %v92 = vld [vmem:[%s3 + $0x3c] sm:$0xf]
    %v93 = vld [vmem:[%s4] sm:$0x1]
    %v95 = vperm.slane %v93, 0
    %v113 = vunpack.c.l.b16 %v77
    %v114 = vunpack.c.l.b16 %v78
    %v115 = vunpack.c.l.b16 %v79
    %v116 = vunpack.c.l.b16 %v80
    %v117 = vunpack.c.l.b16 %v81
    %v118 = vunpack.c.l.b16 %v82
    %v119 = vunpack.c.l.b16 %v83
    %v120 = vunpack.c.l.b16 %v84
    %v121 = vunpack.c.l.b16 %v85
    %v122 = vunpack.c.l.b16 %v86
    %v123 = vunpack.c.l.b16 %v87
    %v124 = vunpack.c.l.b16 %v88
    %v125 = vunpack.c.l.b16 %v89
    %v126 = vunpack.c.l.b16 %v90
    %v127 = vunpack.c.l.b16 %v91
    %v128 = vunpack.c.l.b16 %v92
    %v129 = vpack.c.b16 %v114, %v113
    %v130 = vpack.c.b16 %v116, %v115
    %v131 = vpack.c.b16 %v118, %v117
    %v132 = vpack.c.b16 %v120, %v119
    %v133 = vpack.c.b16 %v122, %v121
    %v134 = vpack.c.b16 %v124, %v123
    %v135 = vpack.c.b16 %v126, %v125
    %v136 = vpack.c.b16 %v128, %v127
    %145 = vmatpush.bf16.msra.mxu0 %v136
    %146 = vmatpush.bf16.msra.mxu0 %v135
    %147 = vmatpush.bf16.msra.mxu0 %v134
    %148 = vmatpush.bf16.msra.mxu0 %v133
    %149 = vmatpush.bf16.msra.mxu0 %v132
    %150 = vmatpush.bf16.msra.mxu0 %v131
    %151 = vmatpush.bf16.msra.mxu0 %v130
    %152 = vmatpush.bf16.msra.mxu0 %v129
    %153 = vmatmul.bf16.gmra.mxu0 %v76
    %v154 = vpop.f32.mrf.mxu0
    %v155 = vadd.f32 %v95, %v154
    %v156 = vpop.f32.mrf.mxu0
    %157 = vdwg.mxu0
    %v158 = vmax.f32 %v155, 0.0
    %v159 = vpack.c.bf16 %v158, %v158
    %v160 = vld [vmem:[%s5] sm:$0xf]
    %v161 = vld [vmem:[%s5 + $0x4] sm:$0xf]
    %v162 = vld [vmem:[%s5 + $0x8] sm:$0xf]
    %v163 = vld [vmem:[%s5 + $0xc] sm:$0xf]
    %v164 = vld [vmem:[%s5 + $0x10] sm:$0xf]
    %v165 = vld [vmem:[%s5 + $0x14] sm:$0xf]
    %v166 = vld [vmem:[%s5 + $0x18] sm:$0xf]
    %v167 = vld [vmem:[%s5 + $0x1c] sm:$0xf]
    %v168 = vld [vmem:[%s6] sm:$0x1]
    %v170 = vperm.slane %v168, 0
    %v180 = vunpack.c.l.b16 %v160
    %v181 = vunpack.c.l.b16 %v161
    %v182 = vunpack.c.l.b16 %v162
    %v183 = vunpack.c.l.b16 %v163
    %v184 = vunpack.c.l.b16 %v164
    %v185 = vunpack.c.l.b16 %v165
    %v186 = vunpack.c.l.b16 %v166
    %v187 = vunpack.c.l.b16 %v167
    %v188 = vpack.c.b16 %v181, %v180
    %v189 = vpack.c.b16 %v183, %v182
    %v190 = vpack.c.b16 %v185, %v184
    %v191 = vpack.c.b16 %v187, %v186
    %vm196 = vcmask 523264
    %v198 = vsel %vm196, %v159, 0
    %200 = vmatpush.bf16.msra.mxu0 0
    %201 = vmatpush.bf16.msra.mxu0 0
    %202 = vmatpush.bf16.msra.mxu0 0
    %203 = vmatpush.bf16.msra.mxu0 0
    %204 = vmatpush.bf16.msra.mxu0 %v191
    %205 = vmatpush.bf16.msra.mxu0 %v190
    %206 = vmatpush.bf16.msra.mxu0 %v189
    %207 = vmatpush.bf16.msra.mxu0 %v188
    %208 = vmatmul.bf16.gmra.mxu0 %v198
    %v209 = vpop.f32.mrf.mxu0
    %v210 = vadd.f32 %v170, %v209
    %v211 = vpop.f32.mrf.mxu0
    %212 = vdwg.mxu0
    %v213 = vmax.f32 %v210, 0.0
    %v214 = vld [vmem:[%s7] sm:$0x1]
    %v216 = vperm.slane %v214, 0
    %v218 = vmul.f32 %v213, %v216
    %v219 = vsel %vm58, %v218, 0.0
    %220 = vadd.xlane.f32.xlu0 %v219
    %v221 = vpop.xlane.xlu0 %220
    %v222 = vld [vmem:[#allocation2] sm:$0x1]
    %224 = vset.pattern.permute.xlu0 0
    %225 = vperm.xlu0 %224, %v222
    %v226 = vpop.permute.xlu0 %225
    %v228 = vperm.slane %v226, 0
    %v229 = vadd.f32 %v221, %v228
    %v231 = vlaneseq
    %v232 = vand.u32 %v231, 127
    %v233 = vperm.slane %v229, %v232
    %vm235 = vcmask 57344
    %236 = vst.msk [vmem:[#allocation3] sm:$0x1] %vm235, %v233
    // Predicated region
    $region38: #{tpu_custom_call.1} parent=1 // pred_check
      _
    $region39: #{tpu_custom_call.1} parent=1 // pred_check_branch
      %238 = sbr.rel (0) target = $region41
    $region40: #{tpu_custom_call.1} parent=1 // pred_region
      %240 = vsyncadd [#allocation4], 0
      %s242 = sshll.u32 [#allocation3], 4
      %s243 = int_to_ptr.vmem [resolvable:$true] %s242
      %s244 = sshll.u32 %s9, 4
      %s245 = int_to_ptr.hbm [resolvable:$true] %s244
      %247 = dma.vmem_to_hbm [thread:$0]  %s243, 16, %s245, [#allocation4]
    $region41: #{tpu_custom_call.1} parent=1 // pred_fallthru
      _
    // Predicated region
    $region42: #{tpu_custom_call.1} parent=1 // pred_check
      _
    $region43: #{tpu_custom_call.1} parent=1 // pred_check_branch
      %249 = sbr.rel (0) target = $region45
    $region44: #{tpu_custom_call.1} parent=1 // pred_region
      %251 = dma.done [#allocation4], 16
    $region45: #{tpu_custom_call.1} parent=1 // pred_fallthru
      _
    %252 = vsyncpa [#allocation4], 1

</llo_original>
